<compile_context>
chip_gen: v5e
topology: v5e:2x2
jax: 0.10.0
libtpu: 0.0.40
codegen_flags: <defaults>
</compile_context>

<pallas_src>
import functools
import math

import jax
import jax.numpy as jnp
from jax import lax
from jax.experimental import pallas as pl
from jax.experimental.pallas import tpu as pltpu

LN_EPS = 1e-5  # torch.nn.LayerNorm default


def _head_kernel(x_ref, wqkv_ref, o_ref, *, scale, dh):
    # x_ref: (S, E) f32, wqkv_ref: (E, 3*Dh) bf16, o_ref: (S, Dh) f32
    # One batch element per grid step.
    x = x_ref[...]

    # Fused QKV projection: one wide MXU matmul, bf16 operands, f32 accumulation.
    qkv = jnp.dot(x.astype(jnp.bfloat16), wqkv_ref[...],
                  preferred_element_type=jnp.float32)           # (S, 3*Dh) f32

    q = qkv[:, 0 * dh:1 * dh]
    k = qkv[:, 1 * dh:2 * dh]
    v = qkv[:, 2 * dh:3 * dh]

    # nn.LayerNorm(a.size()[1:]) created fresh each forward: weight = 1,
    # bias = 0, normalization over ALL non-batch elements, biased (population)
    # variance, eps = 1e-5.  One-pass stats: sum and sum-of-squares.
    inv_n = 1.0 / float(q.shape[0] * q.shape[1])

    def ln_stats(a):
        mu = jnp.sum(a) * inv_n
        ex2 = jnp.sum(a * a) * inv_n
        var = ex2 - mu * mu
        return mu, lax.rsqrt(var + LN_EPS)

    mu_q, inv_q = ln_stats(q)
    mu_k, inv_k = ln_stats(k)
    mu_v, inv_v = ln_stats(v)

    # LayerNorm of K^T over its full (Dh, S) slab equals the transpose of the
    # full-slab LayerNorm of K (mean/var over all elements are transpose
    # invariant), so normalize K and contract against it directly.
    # Fold the 1/sqrt(Dh) attention scale into Q's scalar LN factor instead of
    # scaling the (S, S) score matrix.
    qn = ((q - mu_q) * (inv_q * scale)).astype(jnp.bfloat16)
    kn = ((k - mu_k) * inv_k).astype(jnp.bfloat16)
    vn = ((v - mu_v) * inv_v).astype(jnp.bfloat16)

    # Scores: Q @ K^T expressed as MXU dimension numbers (contract dim 1 of
    # both operands) -- no materialized transpose of kn.
    s = lax.dot_general(qn, kn, (((1,), (1,)), ((), ())),
                        preferred_element_type=jnp.float32)     # (S, S) f32

    # Numerically-stable softmax over the last dim (f32 math, EUP reciprocal).
    s = s - jnp.max(s, axis=-1, keepdims=True)
    p = jnp.exp(s)
    p = p * pl.reciprocal(jnp.sum(p, axis=-1, keepdims=True), approx=True)

    o_ref[...] = jnp.dot(p.astype(jnp.bfloat16), vn,
                         preferred_element_type=jnp.float32)


def head_forward(x, wq, wk, wv):
    B, S, E = x.shape
    Dh = wq.shape[1]
    scale = 1.0 / math.sqrt(Dh)

    # Fuse the three projections: one resident (E, 3*Dh) weight, cast to bf16
    # once here (MXU operand dtype; accumulation stays f32 inside the kernel).
    wqkv = jnp.concatenate([wq, wk, wv], axis=1).astype(jnp.bfloat16)

    kernel = functools.partial(_head_kernel, scale=scale, dh=Dh)

    # Explicit VMEM budget: double-buffered x/out slabs + resident bf16 weight
    # + in-kernel temporaries (qkv, bf16 copies, (S,S) scores/probs), with
    # headroom.  Only raised above the scoped default when the shapes need it.
    io_bytes = 2 * S * E * 4 + 2 * E * 3 * Dh * 2 + 2 * S * Dh * 4
    tmp_bytes = S * 3 * Dh * (4 + 2) + 3 * S * S * 4 + 4 * S * Dh * 4
    vmem_limit = min(128 * 1024 * 1024,
                     max(32 * 1024 * 1024, int(1.5 * (io_bytes + tmp_bytes))))

    # TODO(synk): for large S (where the (S,S) score slab + x block exceed the
    # scoped VMEM, esp. v7x's 64 MiB), tile the query dim flash-style with an
    # online softmax and a LayerNorm-stats prepass; unnecessary at these shapes.
    # TODO(synk): when this head is used inside multi-head attention, batch all
    # H heads into one call so the output last dim is H*Dh (lane-dense >= 128)
    # rather than a single Dh-wide (masked-store) head.
    return pl.pallas_call(
        kernel,
        out_shape=jax.ShapeDtypeStruct((B, S, Dh), jnp.float32),
        grid=(B,),  # B >= 2 and "parallel": both v7x TensorCores get work
        in_specs=[
            pl.BlockSpec((None, S, E), lambda b: (b, 0, 0)),    # x, one batch slab
            pl.BlockSpec((E, 3 * Dh), lambda b: (0, 0)),        # fused Wqkv (resident)
        ],
        out_specs=pl.BlockSpec((None, S, Dh), lambda b: (b, 0, 0)),
        compiler_params=pltpu.CompilerParams(
            dimension_semantics=("parallel",),
            vmem_limit_bytes=vmem_limit),
    )(x, wqkv)


def head_reference(x, wq, wk, wv):
    # Pure-JAX f32 reference mirroring the PyTorch forward, for a sanity check.
    q = x @ wq
    k = x @ wk
    v = x @ wv

    def ln(a):  # full-slab layernorm per batch element
        mu = jnp.mean(a, axis=(-2, -1), keepdims=True)
        var = jnp.mean((a - mu) ** 2, axis=(-2, -1), keepdims=True)
        return (a - mu) / jnp.sqrt(var + LN_EPS)

    qn, kn, vn = ln(q), ln(k), ln(v)
    s = jnp.einsum("bsd,btd->bst", qn, kn) / math.sqrt(wq.shape[1])
    p = jax.nn.softmax(s, axis=-1)
    return jnp.einsum("bst,btd->bsd", p, vn)


if __name__ == "__main__":
    # Small shapes consistent with the module: B=2, S=8, E=32, H=4 -> Dh=8
    B, S, E, H = 2, 8, 32, 4
    Dh = E // H

    key = jax.random.PRNGKey(0)
    kx, kq, kk, kv = jax.random.split(key, 4)
    x = jax.random.normal(kx, (B, S, E), dtype=jnp.float32)
    wq = jax.random.normal(kq, (E, Dh), dtype=jnp.float32)  # torch.randn-style init
    wk = jax.random.normal(kk, (E, Dh), dtype=jnp.float32)
    wv = jax.random.normal(kv, (E, Dh), dtype=jnp.float32)

    out = head_forward(x, wq, wk, wv)
    out = jax.block_until_ready(out)

    ref = head_reference(x, wq, wk, wv)
    assert out.shape == (B, S, Dh)
    # bf16 MXU operands (with f32 accumulation) + approx reciprocal mean the
    # kernel no longer matches the pure-f32 reference to 1e-4; agreement at the
    # ~1e-2 level is the expected bf16 regime, so the tolerance is loosened.
    assert jnp.allclose(out, ref, atol=7.5e-2, rtol=7.5e-2), "mismatch vs reference"

    print("KERNEL_OK")
</pallas_src>

<mosaic_0001>
module attributes {stable_mosaic.version = 11 : i64} {
  func.func @_head_kernel(%arg0: i32, %arg1: memref<1x8x32xf32, #tpu.memory_space<vmem>>, %arg2: memref<32x24xbf16, #tpu.memory_space<vmem>>, %arg3: memref<1x8x8xf32, #tpu.memory_space<vmem>>) attributes {dimension_semantics = [#tpu.dimension_semantics<parallel>], iteration_bounds = array<i64: 2>, scalar_prefetch = 0 : i64, scratch_operands = 0 : i64, tpu.core_type = #tpu.core_type<tc>, window_params = [{transform_indices = @transform_0, window_bounds = array<i64: 1, 8, 32>}, {pipeline_mode = #tpu.pipeline_mode<synchronous>, transform_indices = @transform_1, window_bounds = array<i64: 32, 24>}, {transform_indices = @transform_2, window_bounds = array<i64: 1, 8, 8>}]} {
    %c0 = arith.constant 0 : index
    %c0_0 = arith.constant 0 : index
    %c0_1 = arith.constant 0 : index
    %0 = vector.load %arg1[%c0, %c0_0, %c0_1] : memref<1x8x32xf32, #tpu.memory_space<vmem>>, vector<1x8x32xf32>
    %1 = vector.shape_cast %0 : vector<1x8x32xf32> to vector<8x32xf32>
    %2 = arith.truncf %1 : vector<8x32xf32> to vector<8x32xbf16>
    %c0_2 = arith.constant 0 : index
    %c0_3 = arith.constant 0 : index
    %3 = vector.load %arg2[%c0_2, %c0_3] : memref<32x24xbf16, #tpu.memory_space<vmem>>, vector<32x24xbf16>
    %cst = arith.constant dense<0.000000e+00> : vector<8x24xf32>
    %4 = tpu.matmul %2, %3, %cst {dimension_numbers = #tpu.dot_dimension_numbers<[1], [0], [0], [1], [0, 0, 1, 1], [], []>} : vector<8x32xbf16>, vector<32x24xbf16>, vector<8x24xf32> -> vector<8x24xf32>
    %5 = vector.extract_strided_slice %4 {offsets = [0, 0], sizes = [8, 8], strides = [1, 1]} : vector<8x24xf32> to vector<8x8xf32>
    %6 = vector.extract_strided_slice %4 {offsets = [0, 8], sizes = [8, 8], strides = [1, 1]} : vector<8x24xf32> to vector<8x8xf32>
    %7 = vector.extract_strided_slice %4 {offsets = [0, 16], sizes = [8, 8], strides = [1, 1]} : vector<8x24xf32> to vector<8x8xf32>
    %8 = vector.shape_cast %5 : vector<8x8xf32> to vector<1x8x8xf32>
    %cst_4 = arith.constant dense<0.000000e+00> : vector<1xf32>
    %9 = vector.multi_reduction <add>, %8, %cst_4 [1, 2] : vector<1x8x8xf32> to vector<1xf32>
    %10 = vector.shape_cast %9 : vector<1xf32> to vector<1x1x1xf32>
    %11 = vector.extract %10[0, 0, 0] : f32 from vector<1x1x1xf32>
    %cst_5 = arith.constant 1.562500e-02 : f32
    %12 = arith.mulf %11, %cst_5 : f32
    %13 = arith.mulf %5, %5 : vector<8x8xf32>
    %14 = vector.shape_cast %13 : vector<8x8xf32> to vector<1x8x8xf32>
    %cst_6 = arith.constant dense<0.000000e+00> : vector<1xf32>
    %15 = vector.multi_reduction <add>, %14, %cst_6 [1, 2] : vector<1x8x8xf32> to vector<1xf32>
    %16 = vector.shape_cast %15 : vector<1xf32> to vector<1x1x1xf32>
    %17 = vector.extract %16[0, 0, 0] : f32 from vector<1x1x1xf32>
    %cst_7 = arith.constant 1.562500e-02 : f32
    %18 = arith.mulf %17, %cst_7 : f32
    %19 = arith.mulf %12, %12 : f32
    %20 = arith.subf %18, %19 : f32
    %cst_8 = arith.constant 9.99999974E-6 : f32
    %21 = arith.addf %20, %cst_8 : f32
    %22 = math.rsqrt %21 : f32
    %23 = vector.shape_cast %6 : vector<8x8xf32> to vector<1x8x8xf32>
    %cst_9 = arith.constant dense<0.000000e+00> : vector<1xf32>
    %24 = vector.multi_reduction <add>, %23, %cst_9 [1, 2] : vector<1x8x8xf32> to vector<1xf32>
    %25 = vector.shape_cast %24 : vector<1xf32> to vector<1x1x1xf32>
    %26 = vector.extract %25[0, 0, 0] : f32 from vector<1x1x1xf32>
    %cst_10 = arith.constant 1.562500e-02 : f32
    %27 = arith.mulf %26, %cst_10 : f32
    %28 = arith.mulf %6, %6 : vector<8x8xf32>
    %29 = vector.shape_cast %28 : vector<8x8xf32> to vector<1x8x8xf32>
    %cst_11 = arith.constant dense<0.000000e+00> : vector<1xf32>
    %30 = vector.multi_reduction <add>, %29, %cst_11 [1, 2] : vector<1x8x8xf32> to vector<1xf32>
    %31 = vector.shape_cast %30 : vector<1xf32> to vector<1x1x1xf32>
    %32 = vector.extract %31[0, 0, 0] : f32 from vector<1x1x1xf32>
    %cst_12 = arith.constant 1.562500e-02 : f32
    %33 = arith.mulf %32, %cst_12 : f32
    %34 = arith.mulf %27, %27 : f32
    %35 = arith.subf %33, %34 : f32
    %cst_13 = arith.constant 9.99999974E-6 : f32
    %36 = arith.addf %35, %cst_13 : f32
    %37 = math.rsqrt %36 : f32
    %38 = vector.shape_cast %7 : vector<8x8xf32> to vector<1x8x8xf32>
    %cst_14 = arith.constant dense<0.000000e+00> : vector<1xf32>
    %39 = vector.multi_reduction <add>, %38, %cst_14 [1, 2] : vector<1x8x8xf32> to vector<1xf32>
    %40 = vector.shape_cast %39 : vector<1xf32> to vector<1x1x1xf32>
    %41 = vector.extract %40[0, 0, 0] : f32 from vector<1x1x1xf32>
    %cst_15 = arith.constant 1.562500e-02 : f32
    %42 = arith.mulf %41, %cst_15 : f32
    %43 = arith.mulf %7, %7 : vector<8x8xf32>
    %44 = vector.shape_cast %43 : vector<8x8xf32> to vector<1x8x8xf32>
    %cst_16 = arith.constant dense<0.000000e+00> : vector<1xf32>
    %45 = vector.multi_reduction <add>, %44, %cst_16 [1, 2] : vector<1x8x8xf32> to vector<1xf32>
    %46 = vector.shape_cast %45 : vector<1xf32> to vector<1x1x1xf32>
    %47 = vector.extract %46[0, 0, 0] : f32 from vector<1x1x1xf32>
    %cst_17 = arith.constant 1.562500e-02 : f32
    %48 = arith.mulf %47, %cst_17 : f32
    %49 = arith.mulf %42, %42 : f32
    %50 = arith.subf %48, %49 : f32
    %cst_18 = arith.constant 9.99999974E-6 : f32
    %51 = arith.addf %50, %cst_18 : f32
    %52 = math.rsqrt %51 : f32
    %53 = vector.broadcast %12 : f32 to vector<8x8xf32>
    %54 = arith.subf %5, %53 : vector<8x8xf32>
    %cst_19 = arith.constant 0.353553385 : f32
    %55 = arith.mulf %22, %cst_19 : f32
    %56 = vector.broadcast %55 : f32 to vector<8x8xf32>
    %57 = arith.mulf %54, %56 : vector<8x8xf32>
    %58 = arith.truncf %57 : vector<8x8xf32> to vector<8x8xbf16>
    %59 = vector.broadcast %27 : f32 to vector<8x8xf32>
    %60 = arith.subf %6, %59 : vector<8x8xf32>
    %61 = vector.broadcast %37 : f32 to vector<8x8xf32>
    %62 = arith.mulf %60, %61 : vector<8x8xf32>
    %63 = arith.truncf %62 : vector<8x8xf32> to vector<8x8xbf16>
    %64 = vector.broadcast %42 : f32 to vector<8x8xf32>
    %65 = arith.subf %7, %64 : vector<8x8xf32>
    %66 = vector.broadcast %52 : f32 to vector<8x8xf32>
    %67 = arith.mulf %65, %66 : vector<8x8xf32>
    %68 = arith.truncf %67 : vector<8x8xf32> to vector<8x8xbf16>
    %cst_20 = arith.constant dense<0.000000e+00> : vector<8x8xf32>
    %69 = tpu.matmul %58, %63, %cst_20 {dimension_numbers = #tpu.dot_dimension_numbers<[1], [1], [0], [0], [0, 0, 1, 0], [], []>} : vector<8x8xbf16>, vector<8x8xbf16>, vector<8x8xf32> -> vector<8x8xf32>
    %cst_21 = arith.constant dense<0xFF800000> : vector<8xf32>
    %70 = vector.multi_reduction <maximumf>, %69, %cst_21 [1] : vector<8x8xf32> to vector<8xf32>
    %71 = vector.shape_cast %70 : vector<8xf32> to vector<8x1xf32>
    %72 = vector.broadcast %71 : vector<8x1xf32> to vector<8x8xf32>
    %73 = arith.subf %69, %72 : vector<8x8xf32>
    %74 = math.exp %73 : vector<8x8xf32>
    %cst_22 = arith.constant dense<0.000000e+00> : vector<8xf32>
    %75 = vector.multi_reduction <add>, %74, %cst_22 [1] : vector<8x8xf32> to vector<8xf32>
    %76 = vector.shape_cast %75 : vector<8xf32> to vector<8x1xf32>
    %77 = tpu.reciprocal %76 {approx = true} : vector<8x1xf32> -> vector<8x1xf32>
    %78 = vector.broadcast %77 : vector<8x1xf32> to vector<8x8xf32>
    %79 = arith.mulf %74, %78 : vector<8x8xf32>
    %80 = arith.truncf %79 : vector<8x8xf32> to vector<8x8xbf16>
    %cst_23 = arith.constant dense<0.000000e+00> : vector<8x8xf32>
    %81 = tpu.matmul %80, %68, %cst_23 {dimension_numbers = #tpu.dot_dimension_numbers<[1], [0], [0], [1], [0, 0, 1, 1], [], []>} : vector<8x8xbf16>, vector<8x8xbf16>, vector<8x8xf32> -> vector<8x8xf32>
    %c0_24 = arith.constant 0 : index
    %c0_25 = arith.constant 0 : index
    %c0_26 = arith.constant 0 : index
    %82 = vector.load %arg3[%c0_24, %c0_25, %c0_26] : memref<1x8x8xf32, #tpu.memory_space<vmem>>, vector<1x8x8xf32>
    %83 = vector.shape_cast %82 : vector<1x8x8xf32> to vector<8x8xf32>
    %84 = vector.shape_cast %81 : vector<8x8xf32> to vector<1x8x8xf32>
    tpu.vector_store %arg3[%c0_24, %c0_25, %c0_26], %84 {strides = array<i32>} : memref<1x8x8xf32, #tpu.memory_space<vmem>>, vector<1x8x8xf32>,
    return
  }
  func.func @transform_0(%arg0: i32) -> (i32, i32, i32) {
    %c0_i32 = arith.constant 0 : i32
    %c0_i32_0 = arith.constant 0 : i32
    %c0_i32_1 = arith.constant 0 : i32
    return %arg0, %c0_i32, %c0_i32_0 : i32, i32, i32
  }
  func.func @transform_1(%arg0: i32) -> (i32, i32) {
    %c0_i32 = arith.constant 0 : i32
    %c0_i32_0 = arith.constant 0 : i32
    %c0_i32_1 = arith.constant 0 : i32
    return %c0_i32, %c0_i32_0 : i32, i32
  }
  func.func @transform_2(%arg0: i32) -> (i32, i32, i32) {
    %c0_i32 = arith.constant 0 : i32
    %c0_i32_0 = arith.constant 0 : i32
    %c0_i32_1 = arith.constant 0 : i32
    return %arg0, %c0_i32, %c0_i32_0 : i32, i32, i32
  }
}

</mosaic_0001>

<llo_original>
// kernel: tpu_custom_call.1
$region0: #{tpu_custom_call.1}
  #allocation0 [shape = 'u32[]', space=smem, size = 0x4, offset = 0x4, fixed_abs, tag = 'smem constant byte address 0x4 - core index']
  #allocation1 [shape = 'u32[72,128]{1,0:T(1,128)}', space=vmem, size = 0x9000, scoped, tag = 'internal scratch']
  %s0 = inlined_call_operand.vmem [shape: f32[2,8,32], index: 0, kind: input, shape index: {}]
  %s1 = inlined_call_operand.vmem [shape: bf16[32,24], index: 1, kind: input, shape index: {}]
  %s2 = inlined_call_operand.hbm [shape: f32[2,8,8], index: 2, kind: output, shape index: {}]
  %s3 = sld [smem:[#allocation0]]
  $region41: #{tpu_custom_call.1} parent=0
    _
  %s5 = ssub.s32 1, %s3
  %s6 = scalar_select 0, %s5, %s3
  $region1: #{tpu_custom_call.1} parent=0
    #allocation2 [shape = 'u8[8192]{0}', space=vmem, size = 0x2000, scoped, tag = 'output window, operand 0']
    #allocation3 [shape = 's32[2]{0}', space=sflag, size = 0x8, scoped, tag = 'scoped memory for tpu_custom_call.1']
    %7 = vsyncpa [#allocation3], 0
    %s8 = scalar_lea.sflag [#allocation3], 1
    %9 = vsyncpa %s8, 0
    loop: start=0, step=1, limit=4
    $region2: #{tpu_custom_call.1} parent=1 // loop_pre_header
      _
    $region3: #{tpu_custom_call.1} parent=1 // loop_header
      %s11 = sphi 0, %s15
      %p12 = scmp.ge.s32.totalorder %s11, 4
      %s21 = sphi 0, %s23
      %s24 = sphi 0, %s21
      %s25 = sphi 0, %s24
      %s41 = sphi 0, %s25
      %s45 = sphi 0, %s45
      %s47 = sphi 0, %s45
      %s48 = sphi 0, %s47
      %s62 = sphi 0, %s48
      %s68 = sphi 0, %s70
      %s71 = sphi 0, %s68
      %s72 = sphi 0, %s71
      %s88 = sphi 0, %s72
    $region4: #{tpu_custom_call.1} parent=1 // loop_header_branch
      %14 = sbr.rel (%p12) target = $region8
    $region5: #{tpu_custom_call.1} parent=1 // loop_body
      %s16 = ssub.s32 %s11, 1
      %s17 = ssub.s32 %s11, 2
      %s18 = sadd.s32 %s11, 1
      %s19 = ssub.s32 %s11, %s18
      %p20 = scmp.eq.s32.totalorder %s19, 0
      %s22 = sadd.s32 %s21, 1
      %s23 = scalar_select %p20, %s21, %s22
      %p26 = pneg %p20
      %p27 = scmp.eq.s32.totalorder %s11, 1
      %p28 = por %p26, %p27
      %p29 = scmp.ne.s32.totalorder %s21, %s24
      %p30 = scmp.eq.s32.totalorder %s11, 0
      %p31 = por %p29, %p30
      %p32 = scmp.ne.s32.totalorder %s21, %s24
      %p33 = scmp.eq.s32.totalorder %s16, 1
      %p34 = por %p32, %p33
      %p35 = scmp.ne.s32.totalorder %s24, %s25
      %p36 = scmp.eq.s32.totalorder %s16, 0
      %p37 = por %p35, %p36
      %p38 = scmp.ne.s32.totalorder %s24, %s25
      %p39 = scmp.eq.s32.totalorder %s17, 1
      %p40 = por %p38, %p39
      %p42 = scmp.ne.s32.totalorder %s25, %s41
      %p43 = scmp.eq.s32.totalorder %s17, 0
      %p44 = por %p42, %p43
      %s46 = sadd.s32 %s45, 1
      %p49 = scmp.eq.s32.totalorder %s11, 1
      %p50 = scmp.ne.s32.totalorder %s45, %s47
      %p51 = scmp.eq.s32.totalorder %s11, 0
      %p52 = por %p50, %p51
      %p53 = scmp.ne.s32.totalorder %s45, %s47
      %p54 = scmp.eq.s32.totalorder %s16, 1
      %p55 = por %p53, %p54
      %p56 = scmp.ne.s32.totalorder %s47, %s48
      %p57 = scmp.eq.s32.totalorder %s16, 0
      %p58 = por %p56, %p57
      %p59 = scmp.ne.s32.totalorder %s47, %s48
      %p60 = scmp.eq.s32.totalorder %s17, 1
      %p61 = por %p59, %p60
      %p63 = scmp.ne.s32.totalorder %s48, %s62
      %p64 = scmp.eq.s32.totalorder %s17, 0
      %p65 = por %p63, %p64
      %s66 = ssub.s32 %s11, %s18
      %p67 = scmp.eq.s32.totalorder %s66, 0
      %s69 = sadd.s32 %s68, 1
      %s70 = scalar_select %p67, %s68, %s69
      %p73 = pneg %p67
      %p74 = scmp.eq.s32.totalorder %s11, 1
      %p75 = por %p73, %p74
      %p76 = scmp.ne.s32.totalorder %s68, %s71
      %p77 = scmp.eq.s32.totalorder %s11, 0
      %p78 = por %p76, %p77
      %p79 = scmp.ne.s32.totalorder %s68, %s71
      %p80 = scmp.eq.s32.totalorder %s16, 1
      %p81 = por %p79, %p80
      %p82 = scmp.ne.s32.totalorder %s71, %s72
      %p83 = scmp.eq.s32.totalorder %s16, 0
      %p84 = por %p82, %p83
      %p85 = scmp.ne.s32.totalorder %s71, %s72
      %p86 = scmp.eq.s32.totalorder %s17, 1
      %p87 = por %p85, %p86
      %p89 = scmp.ne.s32.totalorder %s72, %s88
      %p90 = scmp.eq.s32.totalorder %s17, 0
      %p91 = por %p89, %p90
      %p92 = scmp.le.s32.totalorder 1, %s11
      %p93 = scmp.lt.s32.totalorder %s11, 3
      %p94 = pnand %p92, %p93
      %p95 = pneg %p94
      // Predicated region
      $region9: #{tpu_custom_call.1} parent=5 // pred_check
        _
      $region10: #{tpu_custom_call.1} parent=5 // pred_check_branch
        %97 = sbr.rel (%p94) target = $region12
      $region11: #{tpu_custom_call.1} parent=5 // pred_region
        %s98 = ssub.s32 %s11, 1
        // Predicated region
        $region13: #{tpu_custom_call.1} parent=11 // pred_check
          %p99 = pneg %p58
        $region14: #{tpu_custom_call.1} parent=11 // pred_check_branch
          %101 = sbr.rel (%p99) target = $region16
        $region15: #{tpu_custom_call.1} parent=11 // pred_region
          _
        $region16: #{tpu_custom_call.1} parent=11 // pred_fallthru
          _
      $region12: #{tpu_custom_call.1} parent=5 // pred_fallthru
        _
      %p102 = scmp.lt.s32.totalorder %s11, 2
      // Predicated region
      $region17: #{tpu_custom_call.1} parent=5 // pred_check
        %p103 = pneg %p102
      $region18: #{tpu_custom_call.1} parent=5 // pred_check_branch
        %105 = sbr.rel (%p103) target = $region20
      $region19: #{tpu_custom_call.1} parent=5 // pred_region
        // Predicated region
        $region21: #{tpu_custom_call.1} parent=19 // pred_check
          %p106 = pneg %p31
        $region22: #{tpu_custom_call.1} parent=19 // pred_check_branch
          %108 = sbr.rel (%p106) target = $region24
        $region23: #{tpu_custom_call.1} parent=19 // pred_region
          %p109 = scmp.lt.s32.totalorder %s11, 1
          %s110 = scalar_select %p109, %s11, 1
          %s111 = smul.addr %s110, 8
          %s112 = scalar_lea.vmem %s0, %s111
        $region24: #{tpu_custom_call.1} parent=19 // pred_fallthru
          _
      $region20: #{tpu_custom_call.1} parent=5 // pred_fallthru
        _
      %p113 = scmp.le.s32.totalorder 1, %s11
      %p114 = scmp.lt.s32.totalorder %s11, 3
      %p115 = pnand %p113, %p114
      %p116 = pneg %p115
      // Predicated region
      $region25: #{tpu_custom_call.1} parent=5 // pred_check
        _
      $region26: #{tpu_custom_call.1} parent=5 // pred_check_branch
        %118 = sbr.rel (%p115) target = $region28
      $region27: #{tpu_custom_call.1} parent=5 // pred_region
        %s119 = ssub.s32 %s11, 1
        %p120 = scmp.lt.s32.totalorder %s16, 1
        %s121 = scalar_select %p120, %s16, 1
        %s122 = smul.addr %s121, 8
        %s123 = scalar_lea.vmem %s0, %s122
        %p124 = pneg %p37
        %p125 = pneg %p34
        %p126 = pneg %p58
        %p127 = pneg %p55
        %p128 = pneg %p84
        %p129 = pneg %p81
        %s130 = sand.u32 %s71, 1
        %s131 = scalar_lea.sflag [#allocation3], %s130
        %s132 = sand.u32 %s71, 1
        %s133 = smul.addr %s132, 8
        %s134 = scalar_lea.vmem [#allocation2], %s133
        %p135 = scmp.lt.s32.totalorder %s16, 1
        %s136 = scalar_select %p135, %s16, 1
        %s137 = smul.addr %s136, 8
        %s138 = scalar_lea.vmem %s0, %s137
        %v140 = vld [vmem:[%s138] sm:$0xff]
        %v141 = vpack.c.bf16 %v140, %v140
        %v142 = vld [vmem:[%s1] sm:$0xf]
        %v143 = vld [vmem:[%s1 + $0x4] sm:$0xf]
        %v144 = vld [vmem:[%s1 + $0x8] sm:$0xf]
        %v145 = vld [vmem:[%s1 + $0xc] sm:$0xf]
        %v150 = vunpack.c.l.b16 %v142
        %v151 = vunpack.c.l.b16 %v143
        %v152 = vunpack.c.l.b16 %v144
        %v153 = vunpack.c.l.b16 %v145
        %v154 = vpack.c.b16 %v151, %v150
        %v155 = vpack.c.b16 %v153, %v152
        %vm158 = vcmask 261120
        %v160 = vsel %vm158, %v141, 0
        %162 = vmatpush.bf16.msra.mxu0 0
        %163 = vmatpush.bf16.msra.mxu0 0
        %164 = vmatpush.bf16.msra.mxu0 0
        %165 = vmatpush.bf16.msra.mxu0 0
        %166 = vmatpush.bf16.msra.mxu0 0
        %167 = vmatpush.bf16.msra.mxu0 0
        %168 = vmatpush.bf16.msra.mxu0 %v155
        %169 = vmatpush.bf16.msra.mxu0 %v154
        %170 = vmatmul.bf16.gmra.mxu0 %v160
        %v171 = vpop.f32.mrf.mxu0
        %v172 = vadd.f32 0.0, %v171
        %v173 = vpop.f32.mrf.mxu0
        %174 = vdwg.mxu0
        %vm175 = vcmask 64512
        %v176 = vsel %vm175, %v172, 0.0
        %177 = vadd.xlane.f32.xlu0 %v176
        %v178 = vpop.xlane.xlu0 %177
        %v179 = vrot.slane %v178, 4
        %v180 = vadd.f32 %v178, %v179
        %v181 = vrot.slane %v180, 2
        %v182 = vadd.f32 %v180, %v181
        %v183 = vrot.slane %v182, 1
        %v184 = vadd.f32 %v182, %v183
        %s185 = vtos %v184
        %s186 = smul.f32 %s185, 0.015625
        %v187 = vmul.f32 %v172, %v172
        %v188 = vsel %vm175, %v187, 0.0
        %189 = vadd.xlane.f32.xlu0 %v188
        %v190 = vpop.xlane.xlu0 %189
        %v191 = vrot.slane %v190, 4
        %v192 = vadd.f32 %v190, %v191
        %v193 = vrot.slane %v192, 2
        %v194 = vadd.f32 %v192, %v193
        %v195 = vrot.slane %v194, 1
        %v196 = vadd.f32 %v194, %v195
        %s197 = vtos %v196
        %s198 = smul.f32 %s197, 0.015625
        %s199 = smul.f32 %s186, %s186
        %s200 = ssub.f32 %s198, %s199
        %s201 = sadd.f32 %s200, 1e-05
        %v202 = vstv %s201
        %v203 = vrsqrt.pop %v202
        %v204 = vmul.f32 %v203, %v202
        %v205 = vmul.f32 %v204, %v203
        %v206 = vmul.f32 0.5, %v205
        %v207 = vsub.f32 1.5, %v206
        %v208 = vmul.f32 %v203, %v207
        %vm209 = vweird.f32 %v202
        %vm210 = vweird.f32 %v203
        %vm211 = vmor %vm209, %vm210
        %v212 = vsel %vm211, %v203, %v208
        %s213 = vtos %v212
        %215 = vrot.lane.b32.xlu0 %v172, 120
        %v216 = vpop.permute.xlu0 %215
        %v218 = vsel %vm175, %v216, 0.0
        %219 = vadd.xlane.f32.xlu0 %v218
        %v220 = vpop.xlane.xlu0 %219
        %v221 = vrot.slane %v220, 4
        %v222 = vadd.f32 %v220, %v221
        %v223 = vrot.slane %v222, 2
        %v224 = vadd.f32 %v222, %v223
        %v225 = vrot.slane %v224, 1
        %v226 = vadd.f32 %v224, %v225
        %s227 = vtos %v226
        %s228 = smul.f32 %s227, 0.015625
        %230 = vrot.lane.b32.xlu0 %v187, 120
        %v231 = vpop.permute.xlu0 %230
        %v233 = vsel %vm175, %v231, 0.0
        %234 = vadd.xlane.f32.xlu0 %v233
        %v235 = vpop.xlane.xlu0 %234
        %v236 = vrot.slane %v235, 4
        %v237 = vadd.f32 %v235, %v236
        %v238 = vrot.slane %v237, 2
        %v239 = vadd.f32 %v237, %v238
        %v240 = vrot.slane %v239, 1
        %v241 = vadd.f32 %v239, %v240
        %s242 = vtos %v241
        %s243 = smul.f32 %s242, 0.015625
        %s244 = smul.f32 %s228, %s228
        %s245 = ssub.f32 %s243, %s244
        %s246 = sadd.f32 %s245, 1e-05
        %v247 = vstv %s246
        %v248 = vrsqrt.pop %v247
        %v249 = vmul.f32 %v248, %v247
        %v250 = vmul.f32 %v249, %v248
        %v251 = vmul.f32 0.5, %v250
        %v252 = vsub.f32 1.5, %v251
        %v253 = vmul.f32 %v248, %v252
        %vm254 = vweird.f32 %v247
        %vm255 = vweird.f32 %v248
        %vm256 = vmor %vm254, %vm255
        %v257 = vsel %vm256, %v248, %v253
        %s258 = vtos %v257
        %259 = vrot.lane.b32.xlu0 %v172, 112
        %v260 = vpop.permute.xlu0 %259
        %v262 = vsel %vm175, %v260, 0.0
        %263 = vadd.xlane.f32.xlu0 %v262
        %v264 = vpop.xlane.xlu0 %263
        %v265 = vrot.slane %v264, 4
        %v266 = vadd.f32 %v264, %v265
        %v267 = vrot.slane %v266, 2
        %v268 = vadd.f32 %v266, %v267
        %v269 = vrot.slane %v268, 1
        %v270 = vadd.f32 %v268, %v269
        %s271 = vtos %v270
        %s272 = smul.f32 %s271, 0.015625
        %273 = vrot.lane.b32.xlu0 %v187, 112
        %v274 = vpop.permute.xlu0 %273
        %v276 = vsel %vm175, %v274, 0.0
        %277 = vadd.xlane.f32.xlu0 %v276
        %v278 = vpop.xlane.xlu0 %277
        %v279 = vrot.slane %v278, 4
        %v280 = vadd.f32 %v278, %v279
        %v281 = vrot.slane %v280, 2
        %v282 = vadd.f32 %v280, %v281
        %v283 = vrot.slane %v282, 1
        %v284 = vadd.f32 %v282, %v283
        %s285 = vtos %v284
        %s286 = smul.f32 %s285, 0.015625
        %s287 = smul.f32 %s272, %s272
        %s288 = ssub.f32 %s286, %s287
        %s289 = sadd.f32 %s288, 1e-05
        %v290 = vstv %s289
        %v291 = vrsqrt.pop %v290
        %v292 = vmul.f32 %v291, %v290
        %v293 = vmul.f32 %v292, %v291
        %v294 = vmul.f32 0.5, %v293
        %v295 = vsub.f32 1.5, %v294
        %v296 = vmul.f32 %v291, %v295
        %vm297 = vweird.f32 %v290
        %vm298 = vweird.f32 %v291
        %vm299 = vmor %vm297, %vm298
        %v300 = vsel %vm299, %v291, %v296
        %s301 = vtos %v300
        %v302 = vstv %s186
        %v303 = vsub.f32 %v172, %v302
        %s304 = smul.f32 %s213, 0.35355338
        %v305 = vstv %s304
        %v306 = vmul.f32 %v303, %v305
        %v307 = vpack.c.bf16 %v306, %v306
        %v308 = vstv %s228
        %v309 = vsub.f32 %v172, %v308
        %v310 = vstv %s258
        %v311 = vmul.f32 %v309, %v310
        %v312 = vpack.c.bf16 %v311, %v311
        %v313 = vstv %s272
        %v314 = vsub.f32 %v172, %v313
        %v315 = vstv %s301
        %v316 = vmul.f32 %v314, %v315
        %v317 = vpack.c.bf16 %v316, %v316
        %319 = vrot.lane.b32.xlu0 %v312, 120
        %v320 = vpop.permute.xlu0 %319
        %v322 = vsel %vm175, %v307, 0
        %v325 = vsel %vm175, %v320, 0
        %327 = vmatpush.bf16.xpose.msra.mxu0 0
        %328 = vmatpush.bf16.xpose.msra.mxu0 0
        %329 = vmatpush.bf16.xpose.msra.mxu0 0
        %330 = vmatpush.bf16.xpose.msra.mxu0 0
        %331 = vmatpush.bf16.xpose.msra.mxu0 0
        %332 = vmatpush.bf16.xpose.msra.mxu0 0
        %333 = vmatpush.bf16.xpose.msra.mxu0 0
        %334 = vmatpush.bf16.xpose.msra.mxu0 %v325
        %335 = vmatmul.bf16.gmra.mxu0 %v322
        %v336 = vpop.f32.mrf.mxu0
        %v337 = vadd.f32 0.0, %v336
        %v338 = vpop.f32.mrf.mxu0
        %339 = vdwg.mxu0
        %v340 = vsel %vm175, %v337, -inf
        %341 = vmax.xlane.f32.xlu0 %v340
        %v342 = vpop.xlane.xlu0 %341
        %v343 = vsub.f32 %v337, %v342
        %v344 = vmul.f32 %v343, 1.442695
        %v345 = vpow.pop %v344
        %v346 = vsel %vm175, %v345, 0.0
        %347 = vadd.xlane.f32.xlu0 %v346
        %v348 = vpop.xlane.xlu0 %347
        %v349 = vrcp.pop %v348
        %v350 = vmul.f32 %v345, %v349
        %v351 = vpack.c.bf16 %v350, %v350
        %353 = vrot.lane.b32.xlu0 %v317, 112
        %v354 = vpop.permute.xlu0 %353
        %v356 = vsel %vm175, %v351, 0
        %vm358 = vcmask 1043456
        %v360 = vsel %vm358, %v354, 0
        %362 = vmatpush.bf16.msra.mxu0 0
        %363 = vmatpush.bf16.msra.mxu0 0
        %364 = vmatpush.bf16.msra.mxu0 0
        %365 = vmatpush.bf16.msra.mxu0 0
        %366 = vmatpush.bf16.msra.mxu0 0
        %367 = vmatpush.bf16.msra.mxu0 0
        %368 = vmatpush.bf16.msra.mxu0 0
        %369 = vmatpush.bf16.msra.mxu0 %v360
        %370 = vmatmul.bf16.gmra.mxu0 %v356
        %v371 = vpop.f32.mrf.mxu0
        %v372 = vadd.f32 0.0, %v371
        %v373 = vpop.f32.mrf.mxu0
        %374 = vdwg.mxu0
        %375 = vst.msk [vmem:[%s134] sm:$0xff] %vm175, %v372
        %s376 = sand.u32 %s71, 1
        %s377 = scalar_lea.sflag [#allocation3], %s376
        %s378 = sand.u32 %s71, 1
        %s379 = smul.addr %s378, 8
        %s380 = scalar_lea.vmem [#allocation2], %s379
        // Predicated region
        $region29: #{tpu_custom_call.1} parent=27 // pred_check
          %p381 = pneg %p81
        $region30: #{tpu_custom_call.1} parent=27 // pred_check_branch
          %383 = sbr.rel (%p381) target = $region32
        $region31: #{tpu_custom_call.1} parent=27 // pred_region
          %385 = vsyncadd %s377, 0
          %s386 = smul.addr %s16, 8
          %s387 = scalar_lea.hbm %s2, %s386
          %s389 = sshll.u32 %s380, 4
          %s390 = int_to_ptr.vmem [resolvable:$true] %s389
          %s391 = sshll.u32 %s387, 4
          %s392 = int_to_ptr.hbm [resolvable:$true] %s391
          %394 = dma.vmem_to_hbm [thread:$0]  %s390, 128, %s392, %s377
        $region32: #{tpu_custom_call.1} parent=27 // pred_fallthru
          _
      $region28: #{tpu_custom_call.1} parent=5 // pred_fallthru
        _
      %p395 = scmp.le.s32.totalorder 2, %s11
      // Predicated region
      $region33: #{tpu_custom_call.1} parent=5 // pred_check
        %p396 = pneg %p395
      $region34: #{tpu_custom_call.1} parent=5 // pred_check_branch
        %398 = sbr.rel (%p396) target = $region36
      $region35: #{tpu_custom_call.1} parent=5 // pred_region
        %s399 = ssub.s32 %s11, 2
        // Predicated region
        $region37: #{tpu_custom_call.1} parent=35 // pred_check
          %p400 = pneg %p87
        $region38: #{tpu_custom_call.1} parent=35 // pred_check_branch
          %402 = sbr.rel (%p400) target = $region40
        $region39: #{tpu_custom_call.1} parent=35 // pred_region
          %s403 = sand.u32 %s72, 1
          %s404 = scalar_lea.sflag [#allocation3], %s403
          %s405 = sand.u32 %s72, 1
          %s406 = smul.addr %s405, 8
          %s407 = scalar_lea.vmem [#allocation2], %s406
          %409 = dma.done %s404, 128
        $region40: #{tpu_custom_call.1} parent=35 // pred_fallthru
          _
      $region36: #{tpu_custom_call.1} parent=5 // pred_fallthru
        _
    $region6: #{tpu_custom_call.1} parent=1 // loop_footer
      %s15 = sadd.s32 1, %s11
    $region7: #{tpu_custom_call.1} parent=1 // loop_footer_branch
      %10 = sbr.rel target = $region3
    $region8: #{tpu_custom_call.1} parent=1 // loop_exit
      _
    %410 = vsyncpa [#allocation3], 1
    %s411 = scalar_lea.sflag [#allocation3], 1
    %412 = vsyncpa %s411, 1

</llo_original>
